<compile_context>
chip_gen: v7x
topology: tpu7x:2x2x1
jax: 0.10.0
libtpu: 0.0.40
codegen_flags: <defaults>
</compile_context>

<pallas_src>
import functools
import math

import jax
import jax.numpy as jnp
from jax.experimental import pallas as pl
from jax.experimental.pallas import tpu as pltpu


# ---------------------------------------------------------------------------
# Kernel 1: attention density -> global sum of sigmoid(1x1 conv)
#   grid = (B,), accumulating "arbitrary" axis; (1,C)@(C,HW) bf16 dot on the MXU.
# ---------------------------------------------------------------------------
def _density_sum_kernel(x_ref, w_ref, out_ref, *, b_att):
    @pl.when(pl.program_id(0) == 0)
    def _init():
        out_ref[...] = jnp.zeros_like(out_ref)

    s = jnp.dot(w_ref[...], x_ref[0], preferred_element_type=jnp.float32)   # (1, HW)
    d = jax.nn.sigmoid(s + b_att)
    out_ref[...] += jnp.sum(d, axis=1, keepdims=True)                        # (1, 1)


def density_mean(x_bf16, w_att_row, b_att):
    B, C, HW = x_bf16.shape
    total = pl.pallas_call(
        functools.partial(_density_sum_kernel, b_att=float(b_att)),
        out_shape=jax.ShapeDtypeStruct((1, 1), jnp.float32),
        grid=(B,),
        in_specs=[
            pl.BlockSpec((1, C, HW), lambda b: (b, 0, 0)),
            pl.BlockSpec((1, C), lambda b: (0, 0)),
        ],
        out_specs=pl.BlockSpec((1, 1), lambda b: (0, 0)),
        compiler_params=pltpu.CompilerParams(dimension_semantics=("arbitrary",)),
    )(x_bf16, w_att_row)
    return total[0, 0] / float(B * HW)


# ---------------------------------------------------------------------------
# Kernel 2: bilinear deformable gather (one matmul per R-tile) + per-tile BN stats
#   grid = (R_tiles,) "parallel".  The 1x1 conv is already folded into xw, so the
#   matmul M dimension is B*outc and the one-hot build is amortized over the batch.
# ---------------------------------------------------------------------------
def _gather_kernel(idx_ref, g_ref, xw_ref, y_ref, st_ref):
    idx = idx_ref[...]                     # (4, Rt) int32  flattened corner indices
    g = g_ref[...]                         # (4, Rt) bf16   bilinear corner weights
    xw = xw_ref[...]                       # (M, HW) bf16   conv-transformed input, M = B*outc
    hw = xw.shape[1]
    rt = idx.shape[1]

    # One-hot gather matrix (HW, Rt), built directly in bf16: column r holds the 4 corner weights.
    zero = jnp.zeros((), jnp.bfloat16)
    row = jax.lax.broadcasted_iota(jnp.int32, (hw, rt), 0)
    gt = (jnp.where(row == idx[0:1, :], g[0:1, :], zero)
          + jnp.where(row == idx[1:2, :], g[1:2, :], zero)
          + jnp.where(row == idx[2:3, :], g[2:3, :], zero)
          + jnp.where(row == idx[3:4, :], g[3:4, :], zero))
    # TODO(synk): window the HW axis per R-tile (sampling points are spatially local) to cut the
    # O(HW*Rt) one-hot build and the matmul K for large feature maps; needs PrefetchScalarGridSpec
    # with per-tile (hw_base, hw_len) and an index rebase.

    y = jnp.dot(xw, gt, preferred_element_type=jnp.float32)   # (M, Rt) f32, single MXU matmul
    y_ref[...] = y                                             # lane-dense store (Rt on lanes)

    # Per-tile BN statistics, already reduced: [sum(y), sum(y^2)] per (b, outc) row -> (M, 2).
    st_ref[0] = jnp.concatenate(
        [jnp.sum(y, axis=1, keepdims=True), jnp.sum(y * y, axis=1, keepdims=True)], axis=1)


def sample_gather(idx4, g4, xw_bf16, r_tile):
    _, R_pad = idx4.shape
    M, HW = xw_bf16.shape
    nj = R_pad // r_tile
    y, stats = pl.pallas_call(
        _gather_kernel,
        out_shape=(
            jax.ShapeDtypeStruct((M, R_pad), jnp.float32),
            jax.ShapeDtypeStruct((nj, M, 2), jnp.float32),
        ),
        grid=(nj,),
        in_specs=[
            pl.BlockSpec((4, r_tile), lambda j: (0, j)),
            pl.BlockSpec((4, r_tile), lambda j: (0, j)),
            pl.BlockSpec((M, HW), lambda j: (0, 0)),       # resident across the whole grid
        ],
        out_specs=(
            pl.BlockSpec((M, r_tile), lambda j: (0, j)),
            pl.BlockSpec((1, M, 2), lambda j: (j, 0, 0)),
        ),
        compiler_params=pltpu.CompilerParams(
            dimension_semantics=("parallel",),              # both TCs split R tiles on v7x
            vmem_limit_bytes=48 * 1024 * 1024,              # fits v7x's 64 MiB with headroom
        ),
    )(idx4, g4, xw_bf16)
    return y, stats


# ---------------------------------------------------------------------------
# Epilogue: BatchNorm2d (training-mode batch stats) + SiLU — fused by XLA.
# ---------------------------------------------------------------------------
@functools.partial(jax.jit, static_argnums=(4, 5, 6, 7, 8))
def _bn_silu_epilogue(y, stats, gamma, beta, B, outc, R, HN, W_out):
    n_elems = float(B * R)                                   # unpadded count (padded cols are 0)
    tot = jnp.sum(stats, axis=0).reshape(B, outc, 2)
    tot = jnp.sum(tot, axis=0)                               # (outc, 2)
    mean = tot[:, 0] / n_elems
    var = jnp.maximum(tot[:, 1] / n_elems - mean * mean, 0.0)
    inv = jax.lax.rsqrt(var + 1e-5)
    scale = gamma * inv
    shift = beta - mean * scale
    yb = y.reshape(B, outc, -1)
    yn = yb * scale[None, :, None] + shift[None, :, None]
    out = yn * jax.nn.sigmoid(yn)
    return out[:, :, :R].reshape(B, outc, HN, W_out)


# ---------------------------------------------------------------------------
# Sampling-location tables (batch independent since p_conv weight == 0).
# ---------------------------------------------------------------------------
@functools.partial(jax.jit, static_argnums=(1, 2, 3, 4, 5, 6, 7))
def _make_sampling_tables(b_p, N, H_out, W_out, stride, W_in, HW_in, R_pad):
    base_int = round(math.sqrt(N))
    row_number = N // base_int
    pn_x = jnp.repeat(jnp.arange(row_number, dtype=jnp.float32), base_int)   # (N,)
    pn_y = jnp.tile(jnp.arange(base_int, dtype=jnp.float32), row_number)     # (N,)
    h0 = jnp.arange(H_out, dtype=jnp.float32) * stride
    w0 = jnp.arange(W_out, dtype=jnp.float32) * stride

    # row ordering r = (h*N + n)*W_out + w  ==  rearrange('b c h w n -> b c (h n) w')
    px = jnp.broadcast_to((h0[:, None] + (pn_x + b_p[:N])[None, :])[:, :, None],
                          (H_out, N, W_out)).reshape(-1)
    py = jnp.broadcast_to(((pn_y + b_p[N:])[:, None] + w0[None, :])[None, :, :],
                          (H_out, N, W_out)).reshape(-1)
    R = H_out * N * W_out

    # Four bilinear corners: flattened-index clamp + unclamped weights (exactly as the spec).
    qx_lt = jnp.floor(px); qy_lt = jnp.floor(py)
    qx_rb = qx_lt + 1.0;   qy_rb = qy_lt + 1.0
    gx_lt = 1.0 + (qx_lt - px); gx_rb = 1.0 - (qx_rb - px)
    gy_lt = 1.0 + (qy_lt - py); gy_rb = 1.0 - (qy_rb - py)

    def lin(qx, qy):   # truncation like .long(), then clamp of the flattened index
        return jnp.clip((qx * float(W_in) + qy).astype(jnp.int32), 0, HW_in - 1)

    idx4 = jnp.stack([lin(qx_lt, qy_lt), lin(qx_rb, qy_rb),
                      lin(qx_lt, qy_rb), lin(qx_rb, qy_lt)], axis=0)               # (4, R) i32
    g4 = jnp.stack([gx_lt * gy_lt, gx_rb * gy_rb,
                    gx_lt * gy_rb, gx_rb * gy_lt], axis=0).astype(jnp.bfloat16)     # (4, R) bf16

    # Pad R to the tile multiple; padded columns have zero weight -> contribute exactly 0.
    idx4 = jnp.pad(idx4, ((0, 0), (0, R_pad - R)))
    g4 = jnp.pad(g4, ((0, 0), (0, R_pad - R)))
    return idx4, g4


# ---------------------------------------------------------------------------
# Forward pass (glue + kernels)
# ---------------------------------------------------------------------------
def ldconv_forward(x_nchw, params, num_param, stride):
    B, C, H_in, W_in = x_nchw.shape
    HW_in = H_in * W_in
    x_cmaj = x_nchw.reshape(B, C, HW_in)          # channels-major, HW on lanes (native NCHW layout)
    x_bf16 = x_cmaj.astype(jnp.bfloat16)          # shared bf16 copy (density + gather path)

    # -- dynamic sampling budget (host sync mirrors density.mean().item()) -------------------
    w_att_row = params["w_att"].reshape(1, C).astype(jnp.bfloat16)
    dmean = float(jax.device_get(density_mean(x_bf16, w_att_row, params["b_att"])))
    N = max(1, int(num_param * dmean))            # adaptive num_param

    # p_conv weight is zero-initialized in the reference, so offset == broadcast of its bias.
    # TODO(synk): the bias is drawn from a fixed key, not freshly random per forward as when the
    # reference recreates p_conv.
    bound = 1.0 / math.sqrt(C * 9)
    b_p = jax.random.uniform(params["p_bias_key"], (2 * N,), jnp.float32,
                             minval=-bound, maxval=bound)

    H_out = (H_in + 2 - 3) // stride + 1
    W_out = (W_in + 2 - 3) // stride + 1
    base_int = round(math.sqrt(N))
    row_number = N // base_int
    # The reference's _get_p_n .view(1, 2N, 1, 1) itself requires N == row_number*base_int.
    assert row_number * base_int == N, "adaptive N must factor as round(sqrt(N)) * (N // round(sqrt(N)))"
    R = H_out * N * W_out

    # -- tile sizing: keep the one-hot working set (i32 iota 4B + bf16 gt 2B + select temps ~2B)
    #    under ~24 MiB so the kernel fits v7x's 64 MiB VMEM; v5e/v6e get the same tiles (<=1024).
    outc = params["w_conv"].shape[0]
    M = B * outc
    resident = 2 * M * HW_in * 2                               # double-buffered bf16 xw block
    onehot_budget = max(4 * 1024 * 1024, 24 * 1024 * 1024 - resident)
    r_cap = max(128, (onehot_budget // (HW_in * 8)) // 128 * 128)
    r_tile = int(min(1024, r_cap, -(-R // 128) * 128))
    R_pad = -(-R // r_tile) * r_tile
    # TODO(synk): for very large B*outc*HW the resident xw block should fall back to a (nj, B) grid
    # with the one-hot cached in VMEM scratch under pl.when(b == 0).

    idx4, g4 = _make_sampling_tables(b_p, N, H_out, W_out, stride, W_in, HW_in, R_pad)

    # -- 1x1 conv hoisted in front of the gather (linear ops commute); tiny K=C matmul in XLA ----
    xw = jnp.einsum("oc,bcs->bos", params["w_conv"], x_cmaj).reshape(M, HW_in).astype(jnp.bfloat16)

    # -- bilinear gather matmul + per-tile BN statistics ------------------------------------------
    y, stats = sample_gather(idx4, g4, xw, r_tile)             # y: (M, R_pad), stats: (nj, M, 2)

    # -- BatchNorm2d (batch stats, biased var) + SiLU + slice/reshape (fused in XLA) --------------
    return _bn_silu_epilogue(y, stats, params["bn_gamma"], params["bn_beta"],
                             B, outc, R, H_out * N, W_out)


if __name__ == "__main__":
    key = jax.random.PRNGKey(0)
    k_x, k_attw, k_conv, k_pb = jax.random.split(key, 4)

    B, C, H, W = 2, 4, 16, 16
    outc = 8
    num_param = 9
    stride = 1

    x = jax.random.normal(k_x, (B, C, H, W), jnp.float32)

    params = {
        # attention: Conv2d(inc, 1, 1) weight (as (C,1)) and scalar bias
        "w_att": jax.random.normal(k_attw, (C, 1), jnp.float32) * 0.1,
        "b_att": 0.0,
        # 1x1 output conv (bias=None in reference), stored PyTorch-style as (outc, C)
        "w_conv": jax.random.normal(k_conv, (outc, C), jnp.float32) / math.sqrt(C),
        # BatchNorm2d default init
        "bn_gamma": jnp.ones((outc,), jnp.float32),
        "bn_beta": jnp.zeros((outc,), jnp.float32),
        # key for the deterministic p_conv bias (its weight is zero-initialized)
        "p_bias_key": k_pb,
    }

    out = ldconv_forward(x, params, num_param, stride)
    out = jax.block_until_ready(out)
    assert out.ndim == 4 and out.shape[0] == B and out.shape[1] == outc
    print("KERNEL_OK")
</pallas_src>

<mosaic_0001>
module attributes {stable_mosaic.version = 11 : i64} {
  func.func @_density_sum_kernel(%arg0: i32, %arg1: memref<1x4x256xbf16, #tpu.memory_space<vmem>>, %arg2: memref<1x4xbf16, #tpu.memory_space<vmem>>, %arg3: memref<1x1xf32, #tpu.memory_space<vmem>>) attributes {dimension_semantics = [#tpu.dimension_semantics<arbitrary>], iteration_bounds = array<i64: 2>, scalar_prefetch = 0 : i64, scratch_operands = 0 : i64, tpu.core_type = #tpu.core_type<tc>, window_params = [{transform_indices = @transform_0, window_bounds = array<i64: 1, 4, 256>}, {pipeline_mode = #tpu.pipeline_mode<synchronous>, transform_indices = @transform_1, window_bounds = array<i64: 1, 4>}, {pipeline_mode = #tpu.pipeline_mode<synchronous>, transform_indices = @transform_2, window_bounds = array<i64: 1, 1>}]} {
    %c0_i32 = arith.constant 0 : i32
    %0 = arith.cmpi eq, %arg0, %c0_i32 : i32
    %1 = arith.extui %0 : i1 to i32
    %c0_i32_0 = arith.constant 0 : i32
    %2 = arith.cmpi ne, %1, %c0_i32_0 : i32
    scf.if %2 {
      %cst_12 = arith.constant 0.000000e+00 : f32
      %19 = vector.broadcast %cst_12 : f32 to vector<1x1xf32>
      %c0_13 = arith.constant 0 : index
      %c0_14 = arith.constant 0 : index
      %20 = vector.load %arg3[%c0_13, %c0_14] : memref<1x1xf32, #tpu.memory_space<vmem>>, vector<1x1xf32>
      tpu.vector_store %arg3[%c0_13, %c0_14], %19 {strides = array<i32>} : memref<1x1xf32, #tpu.memory_space<vmem>>, vector<1x1xf32>,
    } else {
    }
    %c0 = arith.constant 0 : index
    %c0_1 = arith.constant 0 : index
    %3 = vector.load %arg2[%c0, %c0_1] : memref<1x4xbf16, #tpu.memory_space<vmem>>, vector<1x4xbf16>
    %c0_2 = arith.constant 0 : index
    %c0_3 = arith.constant 0 : index
    %c0_4 = arith.constant 0 : index
    %4 = vector.load %arg1[%c0_2, %c0_3, %c0_4] : memref<1x4x256xbf16, #tpu.memory_space<vmem>>, vector<1x4x256xbf16>
    %5 = vector.shape_cast %4 : vector<1x4x256xbf16> to vector<4x256xbf16>
    %cst = arith.constant dense<0.000000e+00> : vector<1x256xf32>
    %6 = tpu.matmul %3, %5, %cst {dimension_numbers = #tpu.dot_dimension_numbers<[1], [0], [0], [1], [0, 0, 1, 1], [], []>} : vector<1x4xbf16>, vector<4x256xbf16>, vector<1x256xf32> -> vector<1x256xf32>
    %cst_5 = arith.constant 0.000000e+00 : f32
    %7 = vector.broadcast %cst_5 : f32 to vector<1x256xf32>
    %8 = arith.addf %6, %7 : vector<1x256xf32>
    %9 = arith.negf %8 : vector<1x256xf32>
    %10 = math.exp %9 : vector<1x256xf32>
    %cst_6 = arith.constant 1.000000e+00 : f32
    %11 = vector.broadcast %cst_6 : f32 to vector<1x256xf32>
    %12 = arith.addf %11, %10 : vector<1x256xf32>
    %13 = arith.divf %11, %12 : vector<1x256xf32>
    %c0_7 = arith.constant 0 : index
    %c0_8 = arith.constant 0 : index
    %14 = vector.load %arg3[%c0_7, %c0_8] : memref<1x1xf32, #tpu.memory_space<vmem>>, vector<1x1xf32>
    %cst_9 = arith.constant dense<0.000000e+00> : vector<1xf32>
    %15 = vector.multi_reduction <add>, %13, %cst_9 [1] : vector<1x256xf32> to vector<1xf32>
    %16 = vector.shape_cast %15 : vector<1xf32> to vector<1x1xf32>
    %17 = arith.addf %14, %16 : vector<1x1xf32>
    %c0_10 = arith.constant 0 : index
    %c0_11 = arith.constant 0 : index
    %18 = vector.load %arg3[%c0_10, %c0_11] : memref<1x1xf32, #tpu.memory_space<vmem>>, vector<1x1xf32>
    tpu.vector_store %arg3[%c0_10, %c0_11], %17 {strides = array<i32>} : memref<1x1xf32, #tpu.memory_space<vmem>>, vector<1x1xf32>,
    return
  }
  func.func @transform_0(%arg0: i32) -> (i32, i32, i32) {
    %c0_i32 = arith.constant 0 : i32
    %c0_i32_0 = arith.constant 0 : i32
    %c0_i32_1 = arith.constant 0 : i32
    return %arg0, %c0_i32, %c0_i32_0 : i32, i32, i32
  }
  func.func @transform_1(%arg0: i32) -> (i32, i32) {
    %c0_i32 = arith.constant 0 : i32
    %c0_i32_0 = arith.constant 0 : i32
    %c0_i32_1 = arith.constant 0 : i32
    return %c0_i32, %c0_i32_0 : i32, i32
  }
  func.func @transform_2(%arg0: i32) -> (i32, i32) {
    %c0_i32 = arith.constant 0 : i32
    %c0_i32_0 = arith.constant 0 : i32
    %c0_i32_1 = arith.constant 0 : i32
    return %c0_i32, %c0_i32_0 : i32, i32
  }
}

</mosaic_0001>

<llo_original>
// kernel: tpu_custom_call.1
$region0: #{tpu_custom_call.1}
  #allocation0 [shape = 'u32[]', space=smem, size = 0x4, offset = 0x4, fixed_abs, tag = 'smem constant byte address 0x4 - core index']
  #allocation1 [shape = 'u32[144,128]{1,0:T(1,128)}', space=vmem, size = 0x12000, scoped, tag = 'internal scratch']
  %s0 = inlined_call_operand.hbm [shape: bf16[2,4,256], index: 0, kind: input, shape index: {}]
  %s1 = inlined_call_operand.vmem [shape: bf16[1,4], index: 1, kind: input, shape index: {}]
  %s2 = inlined_call_operand.hbm [shape: f32[1,1], index: 2, kind: output, shape index: {}]
  %s3 = sld [smem:[#allocation0]]
  $region49: #{tpu_custom_call.1} parent=0
    _
  %s5 = ssub.s32 1, %s3
  %s6 = scalar_select 0, %s5, %s3
  $region1: #{tpu_custom_call.1} parent=0
    #allocation2 [shape = 'u8[4096]{0}', space=vmem, size = 0x1000, scoped, tag = 'input window, operand 0']
    #allocation3 [shape = 's32[2]{0}', space=sflag, size = 0x8, scoped, tag = 'scoped memory for tpu_custom_call.1']
    #allocation4 [shape = 's32[2]{0}', space=sflag, size = 0x8, scoped, tag = 'scoped memory for tpu_custom_call.1']
    #allocation5 [shape = 'u8[512]{0}', space=vmem, size = 0x400, scoped, tag = 'output window, operand 0, single buffered']
    %7 = vsyncpa [#allocation3], 0
    %s8 = scalar_lea.sflag [#allocation3], 1
    %9 = vsyncpa %s8, 0
    %10 = vsyncpa [#allocation4], 0
    loop: start=0, step=1, limit=4
    $region2: #{tpu_custom_call.1} parent=1 // loop_pre_header
      _
    $region3: #{tpu_custom_call.1} parent=1 // loop_header
      %s12 = sphi 0, %s16
      %p13 = scmp.ge.s32.totalorder %s12, 4
      %s22 = sphi 0, %s24
      %s25 = sphi 0, %s22
      %s26 = sphi 0, %s25
      %s42 = sphi 0, %s26
      %s46 = sphi 0, %s46
      %s48 = sphi 0, %s46
      %s49 = sphi 0, %s48
      %s63 = sphi 0, %s49
      %s67 = sphi 0, %s67
      %s69 = sphi 0, %s67
      %s70 = sphi 0, %s69
      %s84 = sphi 0, %s70
    $region4: #{tpu_custom_call.1} parent=1 // loop_header_branch
      %15 = sbr.rel (%p13) target = $region8
    $region5: #{tpu_custom_call.1} parent=1 // loop_body
      %s17 = ssub.s32 %s12, 1
      %s18 = ssub.s32 %s12, 2
      %s19 = sadd.s32 %s12, 1
      %s20 = ssub.s32 %s12, %s19
      %p21 = scmp.eq.s32.totalorder %s20, 0
      %s23 = sadd.s32 %s22, 1
      %s24 = scalar_select %p21, %s22, %s23
      %p27 = pneg %p21
      %p28 = scmp.eq.s32.totalorder %s12, 1
      %p29 = por %p27, %p28
      %p30 = scmp.ne.s32.totalorder %s22, %s25
      %p31 = scmp.eq.s32.totalorder %s12, 0
      %p32 = por %p30, %p31
      %p33 = scmp.ne.s32.totalorder %s22, %s25
      %p34 = scmp.eq.s32.totalorder %s17, 1
      %p35 = por %p33, %p34
      %p36 = scmp.ne.s32.totalorder %s25, %s26
      %p37 = scmp.eq.s32.totalorder %s17, 0
      %p38 = por %p36, %p37
      %p39 = scmp.ne.s32.totalorder %s25, %s26
      %p40 = scmp.eq.s32.totalorder %s18, 1
      %p41 = por %p39, %p40
      %p43 = scmp.ne.s32.totalorder %s26, %s42
      %p44 = scmp.eq.s32.totalorder %s18, 0
      %p45 = por %p43, %p44
      %s47 = sadd.s32 %s46, 1
      %p50 = scmp.eq.s32.totalorder %s12, 1
      %p51 = scmp.ne.s32.totalorder %s46, %s48
      %p52 = scmp.eq.s32.totalorder %s12, 0
      %p53 = por %p51, %p52
      %p54 = scmp.ne.s32.totalorder %s46, %s48
      %p55 = scmp.eq.s32.totalorder %s17, 1
      %p56 = por %p54, %p55
      %p57 = scmp.ne.s32.totalorder %s48, %s49
      %p58 = scmp.eq.s32.totalorder %s17, 0
      %p59 = por %p57, %p58
      %p60 = scmp.ne.s32.totalorder %s48, %s49
      %p61 = scmp.eq.s32.totalorder %s18, 1
      %p62 = por %p60, %p61
      %p64 = scmp.ne.s32.totalorder %s49, %s63
      %p65 = scmp.eq.s32.totalorder %s18, 0
      %p66 = por %p64, %p65
      %s68 = sadd.s32 %s67, 1
      %p71 = scmp.eq.s32.totalorder %s12, 1
      %p72 = scmp.ne.s32.totalorder %s67, %s69
      %p73 = scmp.eq.s32.totalorder %s12, 0
      %p74 = por %p72, %p73
      %p75 = scmp.ne.s32.totalorder %s67, %s69
      %p76 = scmp.eq.s32.totalorder %s17, 1
      %p77 = por %p75, %p76
      %p78 = scmp.ne.s32.totalorder %s69, %s70
      %p79 = scmp.eq.s32.totalorder %s17, 0
      %p80 = por %p78, %p79
      %p81 = scmp.ne.s32.totalorder %s69, %s70
      %p82 = scmp.eq.s32.totalorder %s18, 1
      %p83 = por %p81, %p82
      %p85 = scmp.ne.s32.totalorder %s70, %s84
      %p86 = scmp.eq.s32.totalorder %s18, 0
      %p87 = por %p85, %p86
      %p88 = scmp.le.s32.totalorder 1, %s12
      %p89 = scmp.lt.s32.totalorder %s12, 3
      %p90 = pnand %p88, %p89
      %p91 = pneg %p90
      // Predicated region
      $region9: #{tpu_custom_call.1} parent=5 // pred_check
        _
      $region10: #{tpu_custom_call.1} parent=5 // pred_check_branch
        %93 = sbr.rel (%p90) target = $region12
      $region11: #{tpu_custom_call.1} parent=5 // pred_region
        %s94 = ssub.s32 %s12, 1
        // Predicated region
        $region13: #{tpu_custom_call.1} parent=11 // pred_check
          %p95 = pneg %p59
        $region14: #{tpu_custom_call.1} parent=11 // pred_check_branch
          %97 = sbr.rel (%p95) target = $region16
        $region15: #{tpu_custom_call.1} parent=11 // pred_region
          _
        $region16: #{tpu_custom_call.1} parent=11 // pred_fallthru
          _
      $region12: #{tpu_custom_call.1} parent=5 // pred_fallthru
        _
      %p98 = scmp.lt.s32.totalorder %s12, 2
      // Predicated region
      $region17: #{tpu_custom_call.1} parent=5 // pred_check
        %p99 = pneg %p98
      $region18: #{tpu_custom_call.1} parent=5 // pred_check_branch
        %101 = sbr.rel (%p99) target = $region20
      $region19: #{tpu_custom_call.1} parent=5 // pred_region
        // Predicated region
        $region21: #{tpu_custom_call.1} parent=19 // pred_check
          %p102 = pneg %p32
        $region22: #{tpu_custom_call.1} parent=19 // pred_check_branch
          %104 = sbr.rel (%p102) target = $region24
        $region23: #{tpu_custom_call.1} parent=19 // pred_region
          %s105 = sand.u32 %s22, 1
          %s106 = scalar_lea.sflag [#allocation3], %s105
          %s107 = sand.u32 %s22, 1
          %s108 = smul.addr %s107, 4
          %s109 = scalar_lea.vmem [#allocation2], %s108
          %s111 = ssub.s32 64, 64
          %112 = vsyncadd %s106, %s111
          %s113 = smul.addr %s12, 2
          %s114 = smul.addr %s113, 32
          %s115 = scalar_lea.hbm %s0, %s114
          %s117 = sshll.u32 %s109, 4
          %s118 = int_to_ptr.vmem [resolvable:$true] %s117
          %120 = dma.hbm_to_vmem [thread:$0]  %s115, 64, %s118, %s106
        $region24: #{tpu_custom_call.1} parent=19 // pred_fallthru
          _
      $region20: #{tpu_custom_call.1} parent=5 // pred_fallthru
        _
      %p121 = scmp.le.s32.totalorder 1, %s12
      %p122 = scmp.lt.s32.totalorder %s12, 3
      %p123 = pnand %p121, %p122
      %p124 = pneg %p123
      // Predicated region
      $region25: #{tpu_custom_call.1} parent=5 // pred_check
        _
      $region26: #{tpu_custom_call.1} parent=5 // pred_check_branch
        %126 = sbr.rel (%p123) target = $region28
      $region27: #{tpu_custom_call.1} parent=5 // pred_region
        %s127 = ssub.s32 %s12, 1
        %s128 = sand.u32 %s25, 1
        %s129 = scalar_lea.sflag [#allocation3], %s128
        %s130 = sand.u32 %s25, 1
        %s131 = smul.addr %s130, 4
        %s132 = scalar_lea.vmem [#allocation2], %s131
        // Predicated region
        $region29: #{tpu_custom_call.1} parent=27 // pred_check
          %p133 = pneg %p38
        $region30: #{tpu_custom_call.1} parent=27 // pred_check_branch
          %135 = sbr.rel (%p133) target = $region32
        $region31: #{tpu_custom_call.1} parent=27 // pred_region
          %136 = dma.done %s129, 64
        $region32: #{tpu_custom_call.1} parent=27 // pred_fallthru
          _
        %s137 = sand.u32 %s25, 1
        %s138 = scalar_lea.sflag [#allocation3], %s137
        %s139 = sand.u32 %s25, 1
        %s140 = smul.addr %s139, 4
        %s141 = scalar_lea.vmem [#allocation2], %s140
        %p142 = pneg %p38
        %p143 = pneg %p35
        %p144 = pneg %p59
        %p145 = pneg %p56
        %p146 = pneg %p80
        %p147 = pneg %p77
        %p149 = scmp.eq.s32.totalorder %s17, 0
        // Predicated region
        $region33: #{tpu_custom_call.1} parent=27 // pred_check
          %p150 = pneg %p149
        $region34: #{tpu_custom_call.1} parent=27 // pred_check_branch
          %152 = sbr.rel (%p150) target = $region36
        $region35: #{tpu_custom_call.1} parent=27 // pred_region
          %vm153 = vcmask 0
          %154 = vst.msk [vmem:[#allocation5] sm:$0x1] %vm153, 0.0
        $region36: #{tpu_custom_call.1} parent=27 // pred_fallthru
          _
        %v155 = vld [vmem:[%s1] sm:$0x1]
        %v156 = vld [vmem:[%s132] sm:$0xf]
        %v159 = vunpack.c.l.s4 1983009808
        %v160 = vunpack.c.0.s8 %v159
        %v161 = vlaneseq
        %v162 = vshrl.u32 %v161, 7
        %v163 = vsub.s32 %v160, %v162
        %v164 = vrot.slane %v156, %v163
        %v165 = vcombine.high %v164, %v164
        %vm166 = vcmask 31744
        %v168 = vsel %vm166, %v155, 0
        %vm170 = vcmask 1041408
        %v172 = vsel %vm170, %v164, 0
        %v175 = vsel %vm170, %v165, 0
        %177 = vmatprep.subr.bf16.mxu0 %v175
        %178 = vmatpush1.bf16.msra.mxu0 %v172
        %179 = vmatprep.subr.bf16.mxu0 0
        %180 = vmatpush1.bf16.msra.mxu0 0
        %181 = vmatprep.subr.bf16.mxu0 0
        %182 = vmatpush1.bf16.msra.mxu0 0
        %183 = vmatprep.subr.bf16.mxu0 0
        %184 = vmatpush1.bf16.msra.mxu0 0
        %185 = vmatprep.subr.bf16.mxu0 0
        %186 = vmatpush1.bf16.msra.mxu0 0
        %187 = vmatprep.subr.bf16.mxu0 0
        %188 = vmatpush1.bf16.msra.mxu0 0
        %189 = vmatprep.subr.bf16.mxu0 0
        %190 = vmatpush1.bf16.msra.mxu0 0
        %191 = vmatprep.subr.bf16.mxu0 0
        %192 = vmatpush1.bf16.msra.mxu0 0
        %193 = vmatprep.subr.bf16.mxu0 0
        %194 = vmatpush1.bf16.msra.mxu0 0
        %195 = vmatprep.subr.bf16.mxu0 0
        %196 = vmatpush1.bf16.msra.mxu0 0
        %197 = vmatprep.subr.bf16.mxu0 0
        %198 = vmatpush1.bf16.msra.mxu0 0
        %199 = vmatprep.subr.bf16.mxu0 0
        %200 = vmatpush1.bf16.msra.mxu0 0
        %201 = vmatprep.subr.bf16.mxu0 0
        %202 = vmatpush1.bf16.msra.mxu0 0
        %203 = vmatprep.subr.bf16.mxu0 0
        %204 = vmatpush1.bf16.msra.mxu0 0
        %205 = vmatprep.subr.bf16.mxu0 0
        %206 = vmatpush1.bf16.msra.mxu0 0
        %207 = vmatprep.subr.bf16.mxu0 0
        %208 = vmatpush1.bf16.msra.mxu0 0
        %209 = vmatprep.mubr.bf16.mxu0 0
        %210 = vmatmul.mubr.bf16.gmra.mrb[0].mxu0 %v168
        %v211 = vpop.f32.mrb[0].mxu0
        %v212 = vadd.f32 0.0, %v211
        %v213 = vpop.f32.mrb[0].mxu0
        %v214 = vadd.f32 0.0, %v213
        %v215 = vpop.f32.mrb[0].mxu0
        %v216 = vpop.f32.mrb[0].mxu0
        %217 = vdwg.mxu0
        %v218 = vxor.u32 %v212, 2147483648
        %v219 = vxor.u32 %v214, 2147483648
        %v220 = vmul.f32 %v218, 1.442695
        %v221 = vpow.pop %v220
        %v222 = vmul.f32 %v219, 1.442695
        %v223 = vpow.pop %v222
        %v224 = vadd.f32 %v221, 1.0
        %v225 = vadd.f32 %v223, 1.0
        %v226 = vrcp.pop %v224
        %v227 = vmul.f32 1.0, %v226
        %v228 = vrcp.pop %v225
        %v229 = vmul.f32 1.0, %v228
        %v230 = vld [vmem:[#allocation5] sm:$0x1]
        %vm231 = vcmask 1040384
        %v232 = vsel %vm231, %v227, 0.0
        %v233 = vsel %vm231, %v229, 0.0
        %v234 = vadd.f32 %v232, %v233
        %235 = vadd.xlane.f32.xlu0 %v234
        %v236 = vpop.xlane.xlu0 %235
        %v237 = vadd.f32 %v230, %v236
        %vm238 = vcmask 0
        %239 = vst.msk [vmem:[#allocation5] sm:$0x1] %vm238, %v237
        // Predicated region
        $region37: #{tpu_custom_call.1} parent=27 // pred_check
          %p240 = pneg %p77
        $region38: #{tpu_custom_call.1} parent=27 // pred_check_branch
          %242 = sbr.rel (%p240) target = $region40
        $region39: #{tpu_custom_call.1} parent=27 // pred_region
          %s244 = ssub.s32 16, 16
          %245 = vsyncadd [#allocation4], %s244
          %s247 = sshll.u32 [#allocation5], 4
          %s248 = int_to_ptr.vmem [resolvable:$true] %s247
          %250 = dma.vmem_to_hbm [thread:$0]  %s248, 16, %s2, [#allocation4]
        $region40: #{tpu_custom_call.1} parent=27 // pred_fallthru
          _
        // Predicated region
        $region41: #{tpu_custom_call.1} parent=27 // pred_check
          %p251 = pneg %p77
        $region42: #{tpu_custom_call.1} parent=27 // pred_check_branch
          %253 = sbr.rel (%p251) target = $region44
        $region43: #{tpu_custom_call.1} parent=27 // pred_region
          %254 = dma.done [#allocation4], 16
        $region44: #{tpu_custom_call.1} parent=27 // pred_fallthru
          _
      $region28: #{tpu_custom_call.1} parent=5 // pred_fallthru
        _
      %p255 = scmp.le.s32.totalorder 2, %s12
      // Predicated region
      $region45: #{tpu_custom_call.1} parent=5 // pred_check
        %p256 = pneg %p255
      $region46: #{tpu_custom_call.1} parent=5 // pred_check_branch
        %258 = sbr.rel (%p256) target = $region48
      $region47: #{tpu_custom_call.1} parent=5 // pred_region
        %s259 = ssub.s32 %s12, 2
      $region48: #{tpu_custom_call.1} parent=5 // pred_fallthru
        _
    $region6: #{tpu_custom_call.1} parent=1 // loop_footer
      %s16 = sadd.s32 1, %s12
    $region7: #{tpu_custom_call.1} parent=1 // loop_footer_branch
      %11 = sbr.rel target = $region3
    $region8: #{tpu_custom_call.1} parent=1 // loop_exit
      _
    %260 = vsyncpa [#allocation3], 1
    %s261 = scalar_lea.sflag [#allocation3], 1
    %262 = vsyncpa %s261, 1
    %263 = vsyncpa [#allocation4], 1
    %s264 = scalar_lea.sflag [#allocation4], 1
    %265 = vsyncpa %s264, 1

</llo_original>
